<compile_context>
chip_gen: v7x
topology: tpu7x:2x2x1
jax: 0.10.0
libtpu: 0.0.40
codegen_flags: <defaults>
</compile_context>

<pallas_src>
import math
import jax
import jax.numpy as jnp
from jax import lax
from jax.experimental import pallas as pl
from jax.experimental.pallas import tpu as pltpu


# ----------------------------------------------------------------------------
# helpers
# ----------------------------------------------------------------------------

def _fit(dim, target, align):
    """Largest tile <= target that divides dim and respects alignment, else dim."""
    if dim <= target:
        return dim
    t = (target // align) * align
    while t >= align:
        if dim % t == 0:
            return t
        t -= align
    return dim


def _row_tile(R, target=256, align=16):
    """Row tile, 16-aligned for bf16 packing; ensure >=2 parallel grid steps
    when possible so v7x's second TensorCore is not idle."""
    tm = _fit(R, target, align)
    if tm == R and R % (2 * align) == 0:
        tm = R // 2
    return tm


def _gelu(x):
    # TODO(synk): HF RoBERTa uses exact erf GELU; tanh approx for lowering safety.
    return jax.nn.gelu(x, approximate=True)


# ----------------------------------------------------------------------------
# LayerNorm (row-tiled, parallel grid) — used for the embedding LN only
# ----------------------------------------------------------------------------

def _layernorm_kernel(eps):
    def kernel(x_ref, g_ref, b_ref, o_ref):
        x = x_ref[...].astype(jnp.float32)
        mu = jnp.mean(x, axis=-1, keepdims=True)
        var = jnp.mean((x - mu) ** 2, axis=-1, keepdims=True)
        y = (x - mu) * lax.rsqrt(var + eps)
        o_ref[...] = (y * g_ref[...] + b_ref[...]).astype(o_ref.dtype)
    return kernel


def layernorm(x, gamma, beta, eps=1e-5):
    R, H = x.shape
    tm = _row_tile(R)
    return pl.pallas_call(
        _layernorm_kernel(eps),
        out_shape=jax.ShapeDtypeStruct((R, H), jnp.bfloat16),
        grid=(R // tm,),
        in_specs=[pl.BlockSpec((tm, H), lambda i: (i, 0)),
                  pl.BlockSpec((1, H), lambda i: (0, 0)),
                  pl.BlockSpec((1, H), lambda i: (0, 0))],
        out_specs=pl.BlockSpec((tm, H), lambda i: (i, 0)),
        compiler_params=pltpu.CompilerParams(dimension_semantics=("parallel",)),
    )(x, gamma, beta)


# ----------------------------------------------------------------------------
# Fused QKV projection + multi-head self-attention (one batch element / step)
# ----------------------------------------------------------------------------

def _attention_kernel(num_heads, head_dim):
    H = num_heads * head_dim

    def kernel(x_ref, wqkv_ref, bqkv_ref, m_ref, o_ref):
        x = x_ref[0]                                     # (S, H) bf16
        # fused QKV projection (1/sqrt(dh) already folded into the Q weights)
        qkv = jnp.dot(x, wqkv_ref[...], preferred_element_type=jnp.float32)
        qkv = (qkv + bqkv_ref[...]).astype(jnp.bfloat16)  # (S, 3H)
        addm = m_ref[0]                                   # (1, S) f32 additive mask
        for h in range(num_heads):                        # unrolled; NH small & static
            lo = h * head_dim
            q = qkv[:, lo:lo + head_dim]
            k = qkv[:, H + lo:H + lo + head_dim]
            v = qkv[:, 2 * H + lo:2 * H + lo + head_dim]
            # q @ k^T without materializing a transpose
            s = lax.dot_general(q, k, (((1,), (1,)), ((), ())),
                                preferred_element_type=jnp.float32) + addm
            s = s - jnp.max(s, axis=-1, keepdims=True)
            p = jnp.exp(s)
            p = p * pl.reciprocal(jnp.sum(p, axis=-1, keepdims=True), approx=True)
            ctx = jnp.dot(p.astype(jnp.bfloat16), v,
                          preferred_element_type=jnp.float32)
            # write head context straight into its output lane slice (no concat)
            o_ref[0, :, lo:lo + head_dim] = ctx.astype(o_ref.dtype)
    return kernel


def attention_qkv(x3d, wqkv, bqkv, add_mask, num_heads):
    """x3d: (B, S, H) bf16; wqkv: (H, 3H) bf16 (Q-scale folded); -> (B, S, H) bf16."""
    B, S, H = x3d.shape
    dh = H // num_heads
    return pl.pallas_call(
        _attention_kernel(num_heads, dh),
        out_shape=jax.ShapeDtypeStruct((B, S, H), jnp.bfloat16),
        grid=(B,),
        in_specs=[pl.BlockSpec((1, S, H), lambda b: (b, 0, 0)),
                  pl.BlockSpec((H, 3 * H), lambda b: (0, 0)),
                  pl.BlockSpec((1, 3 * H), lambda b: (0, 0)),
                  pl.BlockSpec((1, 1, S), lambda b: (b, 0, 0))],
        out_specs=pl.BlockSpec((1, S, H), lambda b: (b, 0, 0)),
        compiler_params=pltpu.CompilerParams(
            dimension_semantics=("parallel",),
            vmem_limit_bytes=64 * 1024 * 1024),
    )(x3d, wqkv, bqkv, add_mask)


# ----------------------------------------------------------------------------
# Fused encoder-layer epilogue:
#   attn-output dense + bias + residual + LN
#   -> FFN (GELU intermediate + output dense)
#   -> adapter_capsule_mask (gated capsule stand-in + gated fc1/fc2 + residual)
#   -> layer residual + output LN
# ----------------------------------------------------------------------------

def _layer_kernel(eps):
    def kernel(ctx_ref, x_ref,
               wo_ref, bo_ref, ag_ref, ab_ref,
               wi_ref, bi_ref, wout_ref, bout_ref,
               wl_ref, bl_ref, gl_ref,
               w1_ref, b1_ref, g1_ref,
               w2_ref, b2_ref, g2_ref,
               lng_ref, lnb_ref, o_ref):
        # attention output dense + bias + residual + LayerNorm (f32 math)
        y = jnp.dot(ctx_ref[...], wo_ref[...], preferred_element_type=jnp.float32)
        y = y + bo_ref[...] + x_ref[...].astype(jnp.float32)
        mu = jnp.mean(y, axis=-1, keepdims=True)
        var = jnp.mean((y - mu) ** 2, axis=-1, keepdims=True)
        ao = (y - mu) * lax.rsqrt(var + eps) * ag_ref[...] + ab_ref[...]
        ao_b = ao.astype(jnp.bfloat16)
        # intermediate (GELU) + output.dense
        inter = _gelu(jnp.dot(ao_b, wi_ref[...],
                              preferred_element_type=jnp.float32) + bi_ref[...])
        x = jnp.dot(inter.astype(jnp.bfloat16), wout_ref[...],
                    preferred_element_type=jnp.float32) + bout_ref[...]
        # adapter_capsule_mask: gated capsule stand-in + gated fc1/fc2 + residual
        cap = (jnp.dot(x.astype(jnp.bfloat16), wl_ref[...],
                       preferred_element_type=jnp.float32) + bl_ref[...]) * gl_ref[...]
        h = x + cap
        h = _gelu(jnp.dot(h.astype(jnp.bfloat16), w1_ref[...],
                          preferred_element_type=jnp.float32) + b1_ref[...]) * g1_ref[...]
        h = (jnp.dot(h.astype(jnp.bfloat16), w2_ref[...],
                     preferred_element_type=jnp.float32) + b2_ref[...]) * g2_ref[...]
        y2 = x + h + ao                     # adapter residual + layer residual
        mu2 = jnp.mean(y2, axis=-1, keepdims=True)
        var2 = jnp.mean((y2 - mu2) ** 2, axis=-1, keepdims=True)
        out = (y2 - mu2) * lax.rsqrt(var2 + eps) * lng_ref[...] + lnb_ref[...]
        o_ref[...] = out.astype(o_ref.dtype)
    return kernel


def encoder_layer(ctx2d, x2d, lp, g1, g2, gl, eps=1e-5):
    R, H = x2d.shape
    a = lp["adapter"]
    I = lp["wi"].shape[1]
    A = a["w_fc1"].shape[1]
    tm = _row_tile(R)
    resident = lambda shape: pl.BlockSpec(shape, lambda i: (0, 0))
    return pl.pallas_call(
        _layer_kernel(eps),
        out_shape=jax.ShapeDtypeStruct((R, H), jnp.bfloat16),
        grid=(R // tm,),
        in_specs=[
            pl.BlockSpec((tm, H), lambda i: (i, 0)),   # ctx (bf16)
            pl.BlockSpec((tm, H), lambda i: (i, 0)),   # residual hidden (bf16)
            resident((H, H)), resident((1, H)),        # wo, bo
            resident((1, H)), resident((1, H)),        # attn LN g, b
            resident((H, I)), resident((1, I)),        # wi, bi
            resident((I, H)), resident((1, H)),        # wout, bout
            resident((H, H)), resident((1, H)), resident((1, H)),   # larger + gate
            resident((H, A)), resident((1, A)), resident((1, A)),   # fc1 + gate
            resident((A, H)), resident((1, H)), resident((1, H)),   # fc2 + gate
            resident((1, H)), resident((1, H)),        # out LN g, b
        ],
        out_specs=pl.BlockSpec((tm, H), lambda i: (i, 0)),
        compiler_params=pltpu.CompilerParams(
            dimension_semantics=("parallel",),
            vmem_limit_bytes=64 * 1024 * 1024),
    )(ctx2d, x2d,
      lp["wo"], lp["bo"], lp["attn_ln_g"], lp["attn_ln_b"],
      lp["wi"], lp["bi"], lp["wout"], lp["bout"],
      a["w_larger"], a["b_larger"], gl,
      a["w_fc1"], a["b_fc1"], g1,
      a["w_fc2"], a["b_fc2"], g2,
      lp["out_ln_g"], lp["out_ln_b"])


# ----------------------------------------------------------------------------
# Fused LM head: dense + GELU + LayerNorm prologue (once per row tile) then
# vocab-tiled decoder matmul with lane-dense output tiles
# ----------------------------------------------------------------------------

def _lm_head_kernel(eps):
    def kernel(x_ref, wd_ref, bd_ref, g_ref, be_ref, wdec_ref, bdec_ref,
               o_ref, h_scr):
        @pl.when(pl.program_id(1) == 0)
        def _():
            h = jnp.dot(x_ref[...], wd_ref[...],
                        preferred_element_type=jnp.float32) + bd_ref[...]
            h = _gelu(h)
            mu = jnp.mean(h, axis=-1, keepdims=True)
            var = jnp.mean((h - mu) ** 2, axis=-1, keepdims=True)
            h = (h - mu) * lax.rsqrt(var + eps) * g_ref[...] + be_ref[...]
            h_scr[...] = h.astype(jnp.bfloat16)

        o_ref[...] = (jnp.dot(h_scr[...], wdec_ref[...],
                              preferred_element_type=jnp.float32)
                      + bdec_ref[...]).astype(o_ref.dtype)
    return kernel


def lm_head(params, seq2d, eps=1e-5):
    R, H = seq2d.shape
    V = params["lm_dec_w"].shape[1]
    tm = _row_tile(R)
    tn = _fit(V, 512, 128)
    return pl.pallas_call(
        _lm_head_kernel(eps),
        out_shape=jax.ShapeDtypeStruct((R, V), jnp.float32),
        grid=(R // tm, V // tn),
        in_specs=[
            pl.BlockSpec((tm, H), lambda i, j: (i, 0)),
            pl.BlockSpec((H, H), lambda i, j: (0, 0)),
            pl.BlockSpec((1, H), lambda i, j: (0, 0)),
            pl.BlockSpec((1, H), lambda i, j: (0, 0)),
            pl.BlockSpec((1, H), lambda i, j: (0, 0)),
            pl.BlockSpec((H, tn), lambda i, j: (0, j)),
            pl.BlockSpec((1, tn), lambda i, j: (0, j)),
        ],
        out_specs=pl.BlockSpec((tm, tn), lambda i, j: (i, j)),
        scratch_shapes=[pltpu.VMEM((tm, H), jnp.bfloat16)],
        compiler_params=pltpu.CompilerParams(
            dimension_semantics=("parallel", "arbitrary"),
            vmem_limit_bytes=64 * 1024 * 1024),
    )(seq2d, params["lm_dense_w"], params["lm_dense_b"],
      params["lm_ln_g"], params["lm_ln_b"],
      params["lm_dec_w"], params["lm_dec_b"])


# ----------------------------------------------------------------------------
# Parameters (deterministic, synthetic). Matmul weights stored bf16; 1/sqrt(dh)
# folded into the Q block of the fused QKV projection.
# ----------------------------------------------------------------------------

def init_params(key, cfg):
    H, I, V, A, NH, T, L, P = (cfg["H"], cfg["I"], cfg["V"], cfg["A"],
                               cfg["NH"], cfg["T"], cfg["L"], cfg["P"])
    dh = H // NH
    scale = 1.0 / math.sqrt(dh)

    def nrm(k, shape):
        return jax.random.normal(k, shape, jnp.float32) * 0.02

    def bf(x):
        return x.astype(jnp.bfloat16)

    keys = iter(jax.random.split(key, 256))
    p = {"cfg": cfg}
    p["word_emb"] = nrm(next(keys), (V, H))
    p["pos_emb"] = nrm(next(keys), (P, H))
    p["type_emb"] = nrm(next(keys), (1, H))
    p["emb_ln_g"] = jnp.ones((1, H), jnp.float32)
    p["emb_ln_b"] = jnp.zeros((1, H), jnp.float32)

    layers = []
    for _ in range(L):
        wqkv = nrm(next(keys), (H, 3 * H))
        wqkv = wqkv.at[:, :H].multiply(scale)          # fold 1/sqrt(dh) into Q
        bqkv = jnp.zeros((3 * H,), jnp.float32)
        bqkv = bqkv.at[:H].multiply(scale)
        lp = {
            "wqkv": bf(wqkv), "bqkv": bqkv.reshape(1, 3 * H),
            "wo": bf(nrm(next(keys), (H, H))), "bo": jnp.zeros((1, H), jnp.float32),
            "attn_ln_g": jnp.ones((1, H), jnp.float32),
            "attn_ln_b": jnp.zeros((1, H), jnp.float32),
            "wi": bf(nrm(next(keys), (H, I))), "bi": jnp.zeros((1, I), jnp.float32),
            "wout": bf(nrm(next(keys), (I, H))), "bout": jnp.zeros((1, H), jnp.float32),
            "out_ln_g": jnp.ones((1, H), jnp.float32),
            "out_ln_b": jnp.zeros((1, H), jnp.float32),
            "adapter": {
                "w_fc1": bf(nrm(next(keys), (H, A))), "b_fc1": jnp.zeros((1, A), jnp.float32),
                "w_fc2": bf(nrm(next(keys), (A, H))), "b_fc2": jnp.zeros((1, H), jnp.float32),
                "w_larger": bf(nrm(next(keys), (H, H))), "b_larger": jnp.zeros((1, H), jnp.float32),
                "efc1": nrm(next(keys), (T, A)) * 50.0,   # task embeddings for gates
                "efc2": nrm(next(keys), (T, H)) * 50.0,
                "elarger": nrm(next(keys), (T, H)) * 50.0,
            },
        }
        layers.append(lp)
    p["layers"] = layers

    p["pooler_w"] = nrm(next(keys), (H, H))
    p["pooler_b"] = jnp.zeros((H,), jnp.float32)

    p["qa_w"] = nrm(next(keys), (H, 1))
    p["qa_b"] = jnp.zeros((1,), jnp.float32)

    p["lm_dense_w"] = bf(nrm(next(keys), (H, H)))
    p["lm_dense_b"] = jnp.zeros((1, H), jnp.float32)
    p["lm_ln_g"] = jnp.ones((1, H), jnp.float32)
    p["lm_ln_b"] = jnp.zeros((1, H), jnp.float32)
    p["lm_dec_w"] = bf(nrm(next(keys), (H, V)))
    p["lm_dec_b"] = jnp.zeros((1, V), jnp.float32)
    return p


# ----------------------------------------------------------------------------
# Gate masks (Net.mask(t, s)) — all 3L gates in three batched sigmoids
# ----------------------------------------------------------------------------

def compute_masks(params, t, s):
    layers = params["layers"]
    e1 = jnp.stack([lp["adapter"]["efc1"] for lp in layers])[:, t, :]       # (L, A)
    e2 = jnp.stack([lp["adapter"]["efc2"] for lp in layers])[:, t, :]       # (L, H)
    el = jnp.stack([lp["adapter"]["elarger"] for lp in layers])[:, t, :]    # (L, H)
    g1 = jax.nn.sigmoid(s * e1)
    g2 = jax.nn.sigmoid(s * e2)
    gl = jax.nn.sigmoid(s * el)
    masks = {}
    for lid in range(len(layers)):
        pref = f"roberta.encoder.layer.{lid}.output.adapter_capsule_mask"
        masks[pref + ".fc1"] = g1[lid:lid + 1]
        masks[pref + ".fc2"] = g2[lid:lid + 1]
        masks[pref + ".capsule_net.tsv_capsules.larger"] = gl[lid:lid + 1]
    return masks


# ----------------------------------------------------------------------------
# Forward pass
# ----------------------------------------------------------------------------

def forward(params, t, input_ids, input_mask, s=1.0, qa_task=None, taskcla=None):
    cfg = params["cfg"]
    H, NH = cfg["H"], cfg["NH"]
    B, S = input_ids.shape
    R = B * S

    # ----- embeddings (RoBERTa position ids from the padding mask) -----
    pad_id = 1
    not_pad = (input_ids != pad_id).astype(jnp.int32)
    pos_ids = jnp.cumsum(not_pad, axis=1) * not_pad + pad_id        # (B, S)
    emb = (jnp.take(params["word_emb"], input_ids, axis=0)
           + jnp.take(params["pos_emb"], pos_ids, axis=0)
           + params["type_emb"][0][None, None, :])                  # (B, S, H) f32
    hidden2d = layernorm(emb.reshape(R, H),
                         params["emb_ln_g"], params["emb_ln_b"])    # (R, H) bf16

    add_mask = ((1.0 - input_mask) * -10000.0).reshape(B, 1, S).astype(jnp.float32)

    masks = compute_masks(params, t, s)

    # ----- encoder layers: 2 pallas_calls per layer -----
    for lid, lp in enumerate(params["layers"]):
        x3d = hidden2d.reshape(B, S, H)
        ctx = attention_qkv(x3d, lp["wqkv"], lp["bqkv"], add_mask, NH)  # (B,S,H) bf16
        pref = f"roberta.encoder.layer.{lid}.output.adapter_capsule_mask"
        hidden2d = encoder_layer(ctx.reshape(R, H), hidden2d, lp,
                                 masks[pref + ".fc1"],
                                 masks[pref + ".fc2"],
                                 masks[pref + ".capsule_net.tsv_capsules.larger"])

    sequence_output = hidden2d.reshape(B, S, H)

    # ----- pooler / QA head: plain XLA (pure launch overhead at this size) -----
    cls = sequence_output[:, 0, :].astype(jnp.float32)               # (B, H)
    pooled_output = jnp.tanh(cls @ params["pooler_w"] + params["pooler_b"])

    # ----- per-task heads: LM head / QA head computed ONCE and shared -----
    lm_logits = None
    qa_logits = None
    y = []
    for t_x, _ in taskcla:
        if qa_task and t_x in qa_task and qa_task[t_x]["data_name"] in ("CSQA", "OBQA"):
            if qa_logits is None:
                qa_logits = pooled_output @ params["qa_w"] + params["qa_b"]   # (B, 1)
            y.append(qa_logits)
        else:
            if lm_logits is None:
                lm_logits = lm_head(params, hidden2d).reshape(B, S, -1)       # (B, S, V)
            y.append(lm_logits)

    return {"outputs": (sequence_output, pooled_output), "y": y, "masks": masks}


# ----------------------------------------------------------------------------
# Main
# ----------------------------------------------------------------------------

if __name__ == "__main__":
    # small RoBERTa-ish config with lane-dense hidden size
    cfg = dict(H=128, I=256, V=256, A=64, NH=4, T=3, L=2, P=64)
    B, S = 2, 16
    taskcla = [(0, 2), (1, 2), (2, 2)]
    qa_task = {0: {"data_name": "CSQA"}}

    key = jax.random.PRNGKey(0)
    k_param, k_ids = jax.random.split(key)
    params = init_params(k_param, cfg)

    input_ids = jax.random.randint(k_ids, (B, S), 2, cfg["V"], dtype=jnp.int32)
    input_mask = jnp.ones((B, S), dtype=jnp.float32)

    out = forward(params, t=0, input_ids=input_ids, input_mask=input_mask,
                  s=1.0, qa_task=qa_task, taskcla=taskcla)
    jax.block_until_ready(out)

    seq, pooled = out["outputs"]
    assert seq.shape == (B, S, cfg["H"])
    assert pooled.shape == (B, cfg["H"])
    assert out["y"][0].shape == (B, 1)
    assert out["y"][1].shape == (B, S, cfg["V"])
    assert len(out["masks"]) == 3 * cfg["L"]
    assert all(bool(jnp.all(jnp.isfinite(v.astype(jnp.float32))))
               for v in [seq, pooled, out["y"][1]])
    print("KERNEL_OK")
</pallas_src>

<mosaic_0001>
module attributes {stable_mosaic.version = 11 : i64} {
  func.func @kernel(%arg0: i32, %arg1: memref<16x128xf32, #tpu.memory_space<vmem>>, %arg2: memref<1x128xf32, #tpu.memory_space<vmem>>, %arg3: memref<1x128xf32, #tpu.memory_space<vmem>>, %arg4: memref<16x128xbf16, #tpu.memory_space<vmem>>) attributes {dimension_semantics = [#tpu.dimension_semantics<parallel>], iteration_bounds = array<i64: 2>, scalar_prefetch = 0 : i64, scratch_operands = 0 : i64, tpu.core_type = #tpu.core_type<tc>, window_params = [{transform_indices = @transform_0, window_bounds = array<i64: 16, 128>}, {pipeline_mode = #tpu.pipeline_mode<synchronous>, transform_indices = @transform_1, window_bounds = array<i64: 1, 128>}, {pipeline_mode = #tpu.pipeline_mode<synchronous>, transform_indices = @transform_2, window_bounds = array<i64: 1, 128>}, {transform_indices = @transform_3, window_bounds = array<i64: 16, 128>}]} {
    %c0 = arith.constant 0 : index
    %c0_0 = arith.constant 0 : index
    %0 = vector.load %arg1[%c0, %c0_0] : memref<16x128xf32, #tpu.memory_space<vmem>>, vector<16x128xf32>
    %cst = arith.constant dense<0.000000e+00> : vector<16xf32>
    %1 = vector.multi_reduction <add>, %0, %cst [1] : vector<16x128xf32> to vector<16xf32>
    %2 = vector.shape_cast %1 : vector<16xf32> to vector<16x1xf32>
    %cst_1 = arith.constant 1.280000e+02 : f32
    %3 = vector.broadcast %cst_1 : f32 to vector<16x1xf32>
    %4 = arith.divf %2, %3 : vector<16x1xf32>
    %5 = vector.broadcast %4 : vector<16x1xf32> to vector<16x128xf32>
    %6 = arith.subf %0, %5 : vector<16x128xf32>
    %7 = arith.mulf %6, %6 : vector<16x128xf32>
    %cst_2 = arith.constant dense<0.000000e+00> : vector<16xf32>
    %8 = vector.multi_reduction <add>, %7, %cst_2 [1] : vector<16x128xf32> to vector<16xf32>
    %9 = vector.shape_cast %8 : vector<16xf32> to vector<16x1xf32>
    %cst_3 = arith.constant 1.280000e+02 : f32
    %10 = vector.broadcast %cst_3 : f32 to vector<16x1xf32>
    %11 = arith.divf %9, %10 : vector<16x1xf32>
    %12 = vector.broadcast %4 : vector<16x1xf32> to vector<16x128xf32>
    %13 = arith.subf %0, %12 : vector<16x128xf32>
    %cst_4 = arith.constant 9.99999974E-6 : f32
    %14 = vector.broadcast %cst_4 : f32 to vector<16x1xf32>
    %15 = arith.addf %11, %14 : vector<16x1xf32>
    %16 = math.rsqrt %15 : vector<16x1xf32>
    %17 = vector.broadcast %16 : vector<16x1xf32> to vector<16x128xf32>
    %18 = arith.mulf %13, %17 : vector<16x128xf32>
    %c0_5 = arith.constant 0 : index
    %c0_6 = arith.constant 0 : index
    %19 = vector.load %arg2[%c0_5, %c0_6] : memref<1x128xf32, #tpu.memory_space<vmem>>, vector<1x128xf32>
    %20 = vector.broadcast %19 : vector<1x128xf32> to vector<16x128xf32>
    %21 = arith.mulf %18, %20 : vector<16x128xf32>
    %c0_7 = arith.constant 0 : index
    %c0_8 = arith.constant 0 : index
    %22 = vector.load %arg3[%c0_7, %c0_8] : memref<1x128xf32, #tpu.memory_space<vmem>>, vector<1x128xf32>
    %23 = vector.broadcast %22 : vector<1x128xf32> to vector<16x128xf32>
    %24 = arith.addf %21, %23 : vector<16x128xf32>
    %25 = arith.truncf %24 : vector<16x128xf32> to vector<16x128xbf16>
    %c0_9 = arith.constant 0 : index
    %c0_10 = arith.constant 0 : index
    %26 = vector.load %arg4[%c0_9, %c0_10] : memref<16x128xbf16, #tpu.memory_space<vmem>>, vector<16x128xbf16>
    tpu.vector_store %arg4[%c0_9, %c0_10], %25 {strides = array<i32>} : memref<16x128xbf16, #tpu.memory_space<vmem>>, vector<16x128xbf16>,
    return
  }
  func.func @transform_0(%arg0: i32) -> (i32, i32) {
    %c0_i32 = arith.constant 0 : i32
    %c0_i32_0 = arith.constant 0 : i32
    return %arg0, %c0_i32 : i32, i32
  }
  func.func @transform_1(%arg0: i32) -> (i32, i32) {
    %c0_i32 = arith.constant 0 : i32
    %c0_i32_0 = arith.constant 0 : i32
    %c0_i32_1 = arith.constant 0 : i32
    return %c0_i32, %c0_i32_0 : i32, i32
  }
  func.func @transform_2(%arg0: i32) -> (i32, i32) {
    %c0_i32 = arith.constant 0 : i32
    %c0_i32_0 = arith.constant 0 : i32
    %c0_i32_1 = arith.constant 0 : i32
    return %c0_i32, %c0_i32_0 : i32, i32
  }
  func.func @transform_3(%arg0: i32) -> (i32, i32) {
    %c0_i32 = arith.constant 0 : i32
    %c0_i32_0 = arith.constant 0 : i32
    return %arg0, %c0_i32 : i32, i32
  }
}

</mosaic_0001>

<llo_original>
// kernel: tpu_custom_call.1
$region0: #{tpu_custom_call.1}
  #allocation0 [shape = 'u32[]', space=smem, size = 0x4, offset = 0x4, fixed_abs, tag = 'smem constant byte address 0x4 - core index']
  #allocation1 [shape = 'u32[144,128]{1,0:T(1,128)}', space=vmem, size = 0x12000, scoped, tag = 'internal scratch']
  %s0 = inlined_call_operand.hbm [shape: f32[32,128], index: 0, kind: input, shape index: {}]
  %s1 = inlined_call_operand.vmem [shape: f32[1,128], index: 1, kind: input, shape index: {}]
  %s2 = inlined_call_operand.vmem [shape: f32[1,128], index: 2, kind: input, shape index: {}]
  %s3 = inlined_call_operand.hbm [shape: bf16[32,128], index: 3, kind: output, shape index: {}]
  %s4 = sld [smem:[#allocation0]]
  $region49: #{tpu_custom_call.1} parent=0
    _
  %s6 = ssub.s32 1, %s4
  %s7 = scalar_select 0, %s6, %s4
  $region1: #{tpu_custom_call.1} parent=0
    #allocation2 [shape = 'u8[16384]{0}', space=vmem, size = 0x4000, scoped, tag = 'input window, operand 0']
    #allocation3 [shape = 's32[2]{0}', space=sflag, size = 0x8, scoped, tag = 'scoped memory for tpu_custom_call.1']
    #allocation4 [shape = 's32[2]{0}', space=sflag, size = 0x8, scoped, tag = 'scoped memory for tpu_custom_call.1']
    #allocation5 [shape = 'u8[8192]{0}', space=vmem, size = 0x2000, scoped, tag = 'output window, operand 0']
    %8 = vsyncpa [#allocation3], 0
    %s9 = scalar_lea.sflag [#allocation3], 1
    %10 = vsyncpa %s9, 0
    %11 = vsyncpa [#allocation4], 0
    %s12 = scalar_lea.sflag [#allocation4], 1
    %13 = vsyncpa %s12, 0
    loop: start=0, step=1, limit=4
    $region2: #{tpu_custom_call.1} parent=1 // loop_pre_header
      _
    $region3: #{tpu_custom_call.1} parent=1 // loop_header
      %s15 = sphi 0, %s19
      %p16 = scmp.ge.s32.totalorder %s15, 4
      %s25 = sphi 0, %s27
      %s28 = sphi 0, %s25
      %s29 = sphi 0, %s28
      %s45 = sphi 0, %s29
      %s49 = sphi 0, %s49
      %s51 = sphi 0, %s49
      %s52 = sphi 0, %s51
      %s66 = sphi 0, %s52
      %s70 = sphi 0, %s70
      %s72 = sphi 0, %s70
      %s73 = sphi 0, %s72
      %s87 = sphi 0, %s73
      %s93 = sphi 0, %s95
      %s96 = sphi 0, %s93
      %s97 = sphi 0, %s96
      %s113 = sphi 0, %s97
    $region4: #{tpu_custom_call.1} parent=1 // loop_header_branch
      %18 = sbr.rel (%p16) target = $region8
    $region5: #{tpu_custom_call.1} parent=1 // loop_body
      %s20 = ssub.s32 %s15, 1
      %s21 = ssub.s32 %s15, 2
      %s22 = sadd.s32 %s15, 1
      %s23 = ssub.s32 %s15, %s22
      %p24 = scmp.eq.s32.totalorder %s23, 0
      %s26 = sadd.s32 %s25, 1
      %s27 = scalar_select %p24, %s25, %s26
      %p30 = pneg %p24
      %p31 = scmp.eq.s32.totalorder %s15, 1
      %p32 = por %p30, %p31
      %p33 = scmp.ne.s32.totalorder %s25, %s28
      %p34 = scmp.eq.s32.totalorder %s15, 0
      %p35 = por %p33, %p34
      %p36 = scmp.ne.s32.totalorder %s25, %s28
      %p37 = scmp.eq.s32.totalorder %s20, 1
      %p38 = por %p36, %p37
      %p39 = scmp.ne.s32.totalorder %s28, %s29
      %p40 = scmp.eq.s32.totalorder %s20, 0
      %p41 = por %p39, %p40
      %p42 = scmp.ne.s32.totalorder %s28, %s29
      %p43 = scmp.eq.s32.totalorder %s21, 1
      %p44 = por %p42, %p43
      %p46 = scmp.ne.s32.totalorder %s29, %s45
      %p47 = scmp.eq.s32.totalorder %s21, 0
      %p48 = por %p46, %p47
      %s50 = sadd.s32 %s49, 1
      %p53 = scmp.eq.s32.totalorder %s15, 1
      %p54 = scmp.ne.s32.totalorder %s49, %s51
      %p55 = scmp.eq.s32.totalorder %s15, 0
      %p56 = por %p54, %p55
      %p57 = scmp.ne.s32.totalorder %s49, %s51
      %p58 = scmp.eq.s32.totalorder %s20, 1
      %p59 = por %p57, %p58
      %p60 = scmp.ne.s32.totalorder %s51, %s52
      %p61 = scmp.eq.s32.totalorder %s20, 0
      %p62 = por %p60, %p61
      %p63 = scmp.ne.s32.totalorder %s51, %s52
      %p64 = scmp.eq.s32.totalorder %s21, 1
      %p65 = por %p63, %p64
      %p67 = scmp.ne.s32.totalorder %s52, %s66
      %p68 = scmp.eq.s32.totalorder %s21, 0
      %p69 = por %p67, %p68
      %s71 = sadd.s32 %s70, 1
      %p74 = scmp.eq.s32.totalorder %s15, 1
      %p75 = scmp.ne.s32.totalorder %s70, %s72
      %p76 = scmp.eq.s32.totalorder %s15, 0
      %p77 = por %p75, %p76
      %p78 = scmp.ne.s32.totalorder %s70, %s72
      %p79 = scmp.eq.s32.totalorder %s20, 1
      %p80 = por %p78, %p79
      %p81 = scmp.ne.s32.totalorder %s72, %s73
      %p82 = scmp.eq.s32.totalorder %s20, 0
      %p83 = por %p81, %p82
      %p84 = scmp.ne.s32.totalorder %s72, %s73
      %p85 = scmp.eq.s32.totalorder %s21, 1
      %p86 = por %p84, %p85
      %p88 = scmp.ne.s32.totalorder %s73, %s87
      %p89 = scmp.eq.s32.totalorder %s21, 0
      %p90 = por %p88, %p89
      %s91 = ssub.s32 %s15, %s22
      %p92 = scmp.eq.s32.totalorder %s91, 0
      %s94 = sadd.s32 %s93, 1
      %s95 = scalar_select %p92, %s93, %s94
      %p98 = pneg %p92
      %p99 = scmp.eq.s32.totalorder %s15, 1
      %p100 = por %p98, %p99
      %p101 = scmp.ne.s32.totalorder %s93, %s96
      %p102 = scmp.eq.s32.totalorder %s15, 0
      %p103 = por %p101, %p102
      %p104 = scmp.ne.s32.totalorder %s93, %s96
      %p105 = scmp.eq.s32.totalorder %s20, 1
      %p106 = por %p104, %p105
      %p107 = scmp.ne.s32.totalorder %s96, %s97
      %p108 = scmp.eq.s32.totalorder %s20, 0
      %p109 = por %p107, %p108
      %p110 = scmp.ne.s32.totalorder %s96, %s97
      %p111 = scmp.eq.s32.totalorder %s21, 1
      %p112 = por %p110, %p111
      %p114 = scmp.ne.s32.totalorder %s97, %s113
      %p115 = scmp.eq.s32.totalorder %s21, 0
      %p116 = por %p114, %p115
      %p117 = scmp.le.s32.totalorder 1, %s15
      %p118 = scmp.lt.s32.totalorder %s15, 3
      %p119 = pnand %p117, %p118
      %p120 = pneg %p119
      // Predicated region
      $region9: #{tpu_custom_call.1} parent=5 // pred_check
        _
      $region10: #{tpu_custom_call.1} parent=5 // pred_check_branch
        %122 = sbr.rel (%p119) target = $region12
      $region11: #{tpu_custom_call.1} parent=5 // pred_region
        %s123 = ssub.s32 %s15, 1
        // Predicated region
        $region13: #{tpu_custom_call.1} parent=11 // pred_check
          %p124 = pneg %p62
        $region14: #{tpu_custom_call.1} parent=11 // pred_check_branch
          %126 = sbr.rel (%p124) target = $region16
        $region15: #{tpu_custom_call.1} parent=11 // pred_region
          _
        $region16: #{tpu_custom_call.1} parent=11 // pred_fallthru
          _
        // Predicated region
        $region17: #{tpu_custom_call.1} parent=11 // pred_check
          %p127 = pneg %p83
        $region18: #{tpu_custom_call.1} parent=11 // pred_check_branch
          %129 = sbr.rel (%p127) target = $region20
        $region19: #{tpu_custom_call.1} parent=11 // pred_region
          _
        $region20: #{tpu_custom_call.1} parent=11 // pred_fallthru
          _
      $region12: #{tpu_custom_call.1} parent=5 // pred_fallthru
        _
      %p130 = scmp.lt.s32.totalorder %s15, 2
      // Predicated region
      $region21: #{tpu_custom_call.1} parent=5 // pred_check
        %p131 = pneg %p130
      $region22: #{tpu_custom_call.1} parent=5 // pred_check_branch
        %133 = sbr.rel (%p131) target = $region24
      $region23: #{tpu_custom_call.1} parent=5 // pred_region
        // Predicated region
        $region25: #{tpu_custom_call.1} parent=23 // pred_check
          %p134 = pneg %p35
        $region26: #{tpu_custom_call.1} parent=23 // pred_check_branch
          %136 = sbr.rel (%p134) target = $region28
        $region27: #{tpu_custom_call.1} parent=23 // pred_region
          %s137 = sand.u32 %s25, 1
          %s138 = scalar_lea.sflag [#allocation3], %s137
          %s139 = sand.u32 %s25, 1
          %s140 = smul.addr %s139, 16
          %s141 = scalar_lea.vmem [#allocation2], %s140
          %s142 = smul.u32 2, %s15
          %s144 = ssub.s32 256, 256
          %145 = vsyncadd %s138, %s144
          %s146 = smul.addr %s142, 128
          %s147 = scalar_lea.hbm %s0, %s146
          %s148 = sshll.u32 %s141, 4
          %s149 = int_to_ptr.vmem [resolvable:$true] %s148
          %154 = dma.hbm_to_vmem [thread:$0]  %s147, 256, %s149, %s138, 128, 128, 8
        $region28: #{tpu_custom_call.1} parent=23 // pred_fallthru
          _
      $region24: #{tpu_custom_call.1} parent=5 // pred_fallthru
        _
      %p155 = scmp.le.s32.totalorder 1, %s15
      %p156 = scmp.lt.s32.totalorder %s15, 3
      %p157 = pnand %p155, %p156
      %p158 = pneg %p157
      // Predicated region
      $region29: #{tpu_custom_call.1} parent=5 // pred_check
        _
      $region30: #{tpu_custom_call.1} parent=5 // pred_check_branch
        %160 = sbr.rel (%p157) target = $region32
      $region31: #{tpu_custom_call.1} parent=5 // pred_region
        %s161 = ssub.s32 %s15, 1
        %s162 = sand.u32 %s28, 1
        %s163 = scalar_lea.sflag [#allocation3], %s162
        %s164 = sand.u32 %s28, 1
        %s165 = smul.addr %s164, 16
        %s166 = scalar_lea.vmem [#allocation2], %s165
        // Predicated region
        $region33: #{tpu_custom_call.1} parent=31 // pred_check
          %p167 = pneg %p41
        $region34: #{tpu_custom_call.1} parent=31 // pred_check_branch
          %169 = sbr.rel (%p167) target = $region36
        $region35: #{tpu_custom_call.1} parent=31 // pred_region
          %170 = dma.done %s163, 256
        $region36: #{tpu_custom_call.1} parent=31 // pred_fallthru
          _
        %s171 = sand.u32 %s28, 1
        %s172 = scalar_lea.sflag [#allocation3], %s171
        %s173 = sand.u32 %s28, 1
        %s174 = smul.addr %s173, 16
        %s175 = scalar_lea.vmem [#allocation2], %s174
        %p176 = pneg %p41
        %p177 = pneg %p38
        %p178 = pneg %p62
        %p179 = pneg %p59
        %p180 = pneg %p83
        %p181 = pneg %p80
        %p182 = pneg %p109
        %p183 = pneg %p106
        %s184 = sand.u32 %s96, 1
        %s185 = scalar_lea.sflag [#allocation4], %s184
        %s186 = sand.u32 %s96, 1
        %s187 = smul.addr %s186, 8
        %s188 = scalar_lea.vmem [#allocation5], %s187
        %s189 = smul.u32 2, %s20
        %s190 = smul.u32 2, %s20
        %v191 = vld [vmem:[%s166] sm:$0xff]
        %v192 = vld [vmem:[%s166 + $0x8] sm:$0xff]
        %193 = vadd.xlane.f32.xlu0 %v191
        %v194 = vpop.xlane.xlu0 %193
        %195 = vadd.xlane.f32.xlu0 %v192
        %v196 = vpop.xlane.xlu0 %195
        %v197 = vrcp.pop 128.0
        %v198 = vmul.f32 %v194, %v197
        %v199 = vmul.f32 %v196, %v197
        %v200 = vsub.f32 %v191, %v198
        %v201 = vsub.f32 %v192, %v199
        %v202 = vmul.f32 %v200, %v200
        %v203 = vmul.f32 %v201, %v201
        %204 = vadd.xlane.f32.xlu0 %v202
        %v205 = vpop.xlane.xlu0 %204
        %206 = vadd.xlane.f32.xlu0 %v203
        %v207 = vpop.xlane.xlu0 %206
        %v208 = vmul.f32 %v205, %v197
        %v209 = vmul.f32 %v207, %v197
        %v210 = vadd.f32 %v208, 1e-05
        %v211 = vadd.f32 %v209, 1e-05
        %v212 = vrsqrt.pop %v210
        %v213 = vrsqrt.pop %v211
        %v214 = vmul.f32 %v200, %v212
        %v215 = vmul.f32 %v201, %v213
        %v216 = vld [vmem:[%s1] sm:$0x1]
        %v218 = vlaneseq
        %v219 = vshrl.u32 %v218, 7
        %v220 = vsub.s32 0, %v219
        %v221 = vrot.slane %v216, %v220
        %v223 = vmul.f32 %v214, %v221
        %v224 = vmul.f32 %v215, %v221
        %v225 = vld [vmem:[%s2] sm:$0x1]
        %v227 = vlaneseq
        %v228 = vshrl.u32 %v227, 7
        %v229 = vsub.s32 0, %v228
        %v230 = vrot.slane %v225, %v229
        %v232 = vadd.f32 %v223, %v230
        %v233 = vadd.f32 %v224, %v230
        %v234 = vpack.c.bf16 %v233, %v232
        %v236 = vunpack.c.l.b16 %v234
        %v237 = vunpack.c.h.b16 %v234
        %v238 = vpack.c.b16 %v236, %v236
        %v239 = vpack.c.b16 %v237, %v237
        %242 = vst [vmem:[%s188] sm:$0xf] %v238
        %243 = vst [vmem:[%s188 + $0x4] sm:$0xf] %v239
        %s244 = sand.u32 %s96, 1
        %s245 = scalar_lea.sflag [#allocation4], %s244
        %s246 = sand.u32 %s96, 1
        %s247 = smul.addr %s246, 8
        %s248 = scalar_lea.vmem [#allocation5], %s247
        // Predicated region
        $region37: #{tpu_custom_call.1} parent=31 // pred_check
          %p249 = pneg %p106
        $region38: #{tpu_custom_call.1} parent=31 // pred_check_branch
          %251 = sbr.rel (%p249) target = $region40
        $region39: #{tpu_custom_call.1} parent=31 // pred_region
          %s252 = smul.u32 2, %s20
          %s254 = ssub.s32 128, 128
          %255 = vsyncadd %s245, %s254
          %s256 = smul.addr %s252, 64
          %s257 = scalar_lea.hbm %s3, %s256
          %s258 = sshll.u32 %s248, 4
          %s259 = int_to_ptr.vmem [resolvable:$true] %s258
          %264 = dma.vmem_to_hbm [thread:$0]  %s259, 128, %s257, %s245, 64, 64, 4
        $region40: #{tpu_custom_call.1} parent=31 // pred_fallthru
          _
      $region32: #{tpu_custom_call.1} parent=5 // pred_fallthru
        _
      %p265 = scmp.le.s32.totalorder 2, %s15
      // Predicated region
      $region41: #{tpu_custom_call.1} parent=5 // pred_check
        %p266 = pneg %p265
      $region42: #{tpu_custom_call.1} parent=5 // pred_check_branch
        %268 = sbr.rel (%p266) target = $region44
      $region43: #{tpu_custom_call.1} parent=5 // pred_region
        %s269 = ssub.s32 %s15, 2
        // Predicated region
        $region45: #{tpu_custom_call.1} parent=43 // pred_check
          %p270 = pneg %p112
        $region46: #{tpu_custom_call.1} parent=43 // pred_check_branch
          %272 = sbr.rel (%p270) target = $region48
        $region47: #{tpu_custom_call.1} parent=43 // pred_region
          %s273 = sand.u32 %s97, 1
          %s274 = scalar_lea.sflag [#allocation4], %s273
          %s275 = sand.u32 %s97, 1
          %s276 = smul.addr %s275, 8
          %s277 = scalar_lea.vmem [#allocation5], %s276
          %278 = dma.done %s274, 128
        $region48: #{tpu_custom_call.1} parent=43 // pred_fallthru
          _
      $region44: #{tpu_custom_call.1} parent=5 // pred_fallthru
        _
    $region6: #{tpu_custom_call.1} parent=1 // loop_footer
      %s19 = sadd.s32 1, %s15
    $region7: #{tpu_custom_call.1} parent=1 // loop_footer_branch
      %14 = sbr.rel target = $region3
    $region8: #{tpu_custom_call.1} parent=1 // loop_exit
      _
    %279 = vsyncpa [#allocation3], 1
    %s280 = scalar_lea.sflag [#allocation3], 1
    %281 = vsyncpa %s280, 1
    %282 = vsyncpa [#allocation4], 1
    %s283 = scalar_lea.sflag [#allocation4], 1
    %284 = vsyncpa %s283, 1

</llo_original>
